<compile_context>
chip_gen: v7x
topology: tpu7x:2x2x1
jax: 0.10.0
libtpu: 0.0.40
codegen_flags: <defaults>
</compile_context>

<pallas_src>
import jax
import jax.numpy as jnp
import numpy as np
from jax.experimental import pallas as pl
from jax.experimental.pallas import tpu as pltpu

LANE = 128  # lane width; K and Cout are zero-padded to multiples of this.


def _round_up(a, b):
    return (a + b - 1) // b * b


def gemm_bias_relu_kernel(a_ref, w_ref, bias_ref, o_ref):
    # a_ref:    (M_TILE, K_pad)      bf16 im2col patch rows (zero-padded K / M)
    # w_ref:    (K_pad, Cout_pad)    bf16 BN-scale-folded weights
    # bias_ref: (1, Cout_pad)        f32 folded BN bias
    # o_ref:    (M_TILE, Cout_pad)   f32 lane-dense output tile
    acc = jnp.dot(a_ref[...], w_ref[...], preferred_element_type=jnp.float32)
    o_ref[...] = jnp.maximum(acc + bias_ref[...], 0.0).astype(o_ref.dtype)


def basic_conv(x_nchw, w_oihw, gamma, beta, running_mean, running_var,
               *, stride=1, padding=1, eps=1e-5):
    """BasicConv forward: Conv2d(bias=False) + BatchNorm2d(eval) + ReLU.

    x_nchw: (N, Cin, H, W) float32
    w_oihw: (Cout, Cin, KH, KW) float32
    returns (N, Cout, Hout, Wout) float32
    """
    assert stride == 1, "this kernel implements stride=1"
    N, Cin, H, W = x_nchw.shape
    Cout, _, KH, KW = w_oihw.shape
    Hout = H + 2 * padding - KH + 1
    Wout = W + 2 * padding - KW + 1
    K = KH * KW * Cin

    K_pad = _round_up(K, LANE)          # 36 -> 128 (lane-dense A reads)
    Cout_pad = _round_up(Cout, LANE)    # 8  -> 128 (lane-dense output stores)

    # ---- Fold BatchNorm (eval) into the conv weights / a per-channel bias. ----
    scale = gamma / jnp.sqrt(running_var + eps)                    # (Cout,)
    bias = beta - running_mean * scale                             # (Cout,)
    w_scaled = w_oihw * scale[:, None, None, None]                 # (Cout,Cin,KH,KW)
    # (KH, KW, Cin, Cout) -> (K, Cout); flattening order matches the im2col
    # tap concatenation below (kh outer, kw, cin inner).
    w2 = jnp.transpose(w_scaled, (2, 3, 1, 0)).reshape(K, Cout)
    w2 = jnp.pad(w2, ((0, K_pad - K), (0, Cout_pad - Cout))).astype(jnp.bfloat16)
    bias_p = jnp.pad(bias, (0, Cout_pad - Cout)).reshape(1, Cout_pad).astype(jnp.float32)

    # ---- Wrapper-side im2col (boundary XLA ops; kernel stays relayout-free). ----
    x_nhwc = jnp.transpose(x_nchw, (0, 2, 3, 1)).astype(jnp.float32)
    x_pad = jnp.pad(x_nhwc, ((0, 0), (padding, padding), (padding, padding), (0, 0)))
    taps = [x_pad[:, kh:kh + Hout, kw:kw + Wout, :]
            for kh in range(KH) for kw in range(KW)]
    patches = jnp.concatenate(taps, axis=-1)                       # (N,Hout,Wout,K)
    M_total = N * Hout * Wout
    patches = patches.reshape(M_total, K)

    # M tiling: big tiles to amortize the ~0.35us/step overhead, but keep >=2
    # grid steps when possible so v7x's 2 TensorCores both get work.
    if M_total >= 1024:
        m_tile = 512
    else:
        m_tile = max(8, _round_up(max(M_total // 2, 8), 8))
    M_pad = _round_up(M_total, m_tile)
    grid_m = M_pad // m_tile

    patches = jnp.pad(patches, ((0, M_pad - M_total), (0, K_pad - K)))
    patches = patches.astype(jnp.bfloat16)                         # (M_pad, K_pad)

    # Working set per step (~1-2 MB double-buffered) is far below every
    # generation's scoped VMEM; budget explicitly but modestly.
    out = pl.pallas_call(
        gemm_bias_relu_kernel,
        out_shape=jax.ShapeDtypeStruct((M_pad, Cout_pad), jnp.float32),
        grid=(grid_m,),
        in_specs=[
            pl.BlockSpec((m_tile, K_pad), lambda m: (m, 0)),
            pl.BlockSpec((K_pad, Cout_pad), lambda m: (0, 0)),
            pl.BlockSpec((1, Cout_pad), lambda m: (0, 0)),
        ],
        out_specs=pl.BlockSpec((m_tile, Cout_pad), lambda m: (m, 0)),
        compiler_params=pltpu.CompilerParams(
            dimension_semantics=("parallel",),
            vmem_limit_bytes=16 * 1024 * 1024,
        ),
    )(patches, w2, bias_p)

    # Drop M / Cout padding and return to NCHW (slice+reshape+transpose fuse in XLA).
    out = out[:M_total, :Cout].reshape(N, Hout, Wout, Cout)
    return jnp.transpose(out, (0, 3, 1, 2))


def _reference(x_nchw, w_oihw, gamma, beta, running_mean, running_var,
               *, padding=1, eps=1e-5):
    y = jax.lax.conv_general_dilated(
        x_nchw, w_oihw, window_strides=(1, 1),
        padding=[(padding, padding), (padding, padding)],
        dimension_numbers=("NCHW", "OIHW", "NCHW"))
    inv = 1.0 / jnp.sqrt(running_var + eps)
    y = (y - running_mean[None, :, None, None]) * inv[None, :, None, None]
    y = y * gamma[None, :, None, None] + beta[None, :, None, None]
    return jnp.maximum(y, 0.0)


if __name__ == "__main__":
    # BasicConv(in_planes=4, out_planes=8, kernel_size=3, stride=1, padding=1)
    N, Cin, H, W = 2, 4, 16, 16
    Cout, KH, KW = 8, 3, 3

    key = jax.random.PRNGKey(0)
    kx, kw, kg, kb, km, kv = jax.random.split(key, 6)

    x = jax.random.normal(kx, (N, Cin, H, W), dtype=jnp.float32)
    w = jax.random.normal(kw, (Cout, Cin, KH, KW), dtype=jnp.float32) * 0.1
    gamma = 1.0 + 0.1 * jax.random.normal(kg, (Cout,), dtype=jnp.float32)
    beta = 0.1 * jax.random.normal(kb, (Cout,), dtype=jnp.float32)
    running_mean = 0.05 * jax.random.normal(km, (Cout,), dtype=jnp.float32)
    running_var = 1.0 + 0.1 * jax.random.uniform(kv, (Cout,), dtype=jnp.float32)

    out = basic_conv(x, w, gamma, beta, running_mean, running_var,
                     stride=1, padding=1)
    out = jax.block_until_ready(out)

    ref = _reference(x, w, gamma, beta, running_mean, running_var, padding=1)
    # Tolerance note: the kernel uses explicit bf16 operands with f32 MXU
    # accumulation (same as the previous accepted version's default MXU pass),
    # and the BN scale is folded into the weights before rounding, so
    # differences up to ~1e-3 are expected.
    np.testing.assert_allclose(np.asarray(out), np.asarray(ref),
                               rtol=2e-2, atol=2e-2)
    print("KERNEL_OK")
</pallas_src>

<mosaic_0001>
module attributes {stable_mosaic.version = 11 : i64} {
  func.func @gemm_bias_relu_kernel(%arg0: i32, %arg1: memref<256x128xbf16, #tpu.memory_space<vmem>>, %arg2: memref<128x128xbf16, #tpu.memory_space<vmem>>, %arg3: memref<1x128xf32, #tpu.memory_space<vmem>>, %arg4: memref<256x128xf32, #tpu.memory_space<vmem>>) attributes {dimension_semantics = [#tpu.dimension_semantics<parallel>], iteration_bounds = array<i64: 2>, scalar_prefetch = 0 : i64, scratch_operands = 0 : i64, tpu.core_type = #tpu.core_type<tc>, window_params = [{transform_indices = @transform_0, window_bounds = array<i64: 256, 128>}, {pipeline_mode = #tpu.pipeline_mode<synchronous>, transform_indices = @transform_1, window_bounds = array<i64: 128, 128>}, {pipeline_mode = #tpu.pipeline_mode<synchronous>, transform_indices = @transform_2, window_bounds = array<i64: 1, 128>}, {transform_indices = @transform_3, window_bounds = array<i64: 256, 128>}]} {
    %c0 = arith.constant 0 : index
    %c0_0 = arith.constant 0 : index
    %0 = vector.load %arg1[%c0, %c0_0] : memref<256x128xbf16, #tpu.memory_space<vmem>>, vector<256x128xbf16>
    %c0_1 = arith.constant 0 : index
    %c0_2 = arith.constant 0 : index
    %1 = vector.load %arg2[%c0_1, %c0_2] : memref<128x128xbf16, #tpu.memory_space<vmem>>, vector<128x128xbf16>
    %cst = arith.constant dense<0.000000e+00> : vector<256x128xf32>
    %2 = tpu.matmul %0, %1, %cst {dimension_numbers = #tpu.dot_dimension_numbers<[1], [0], [0], [1], [0, 0, 1, 1], [], []>} : vector<256x128xbf16>, vector<128x128xbf16>, vector<256x128xf32> -> vector<256x128xf32>
    %c0_3 = arith.constant 0 : index
    %c0_4 = arith.constant 0 : index
    %3 = vector.load %arg3[%c0_3, %c0_4] : memref<1x128xf32, #tpu.memory_space<vmem>>, vector<1x128xf32>
    %4 = vector.broadcast %3 : vector<1x128xf32> to vector<256x128xf32>
    %5 = arith.addf %2, %4 : vector<256x128xf32>
    %cst_5 = arith.constant 0.000000e+00 : f32
    %6 = vector.broadcast %cst_5 : f32 to vector<256x128xf32>
    %7 = arith.maximumf %5, %6 : vector<256x128xf32>
    %c0_6 = arith.constant 0 : index
    %c0_7 = arith.constant 0 : index
    %8 = vector.load %arg4[%c0_6, %c0_7] : memref<256x128xf32, #tpu.memory_space<vmem>>, vector<256x128xf32>
    tpu.vector_store %arg4[%c0_6, %c0_7], %7 {strides = array<i32>} : memref<256x128xf32, #tpu.memory_space<vmem>>, vector<256x128xf32>,
    return
  }
  func.func @transform_0(%arg0: i32) -> (i32, i32) {
    %c0_i32 = arith.constant 0 : i32
    %c0_i32_0 = arith.constant 0 : i32
    return %arg0, %c0_i32 : i32, i32
  }
  func.func @transform_1(%arg0: i32) -> (i32, i32) {
    %c0_i32 = arith.constant 0 : i32
    %c0_i32_0 = arith.constant 0 : i32
    %c0_i32_1 = arith.constant 0 : i32
    return %c0_i32, %c0_i32_0 : i32, i32
  }
  func.func @transform_2(%arg0: i32) -> (i32, i32) {
    %c0_i32 = arith.constant 0 : i32
    %c0_i32_0 = arith.constant 0 : i32
    %c0_i32_1 = arith.constant 0 : i32
    return %c0_i32, %c0_i32_0 : i32, i32
  }
  func.func @transform_3(%arg0: i32) -> (i32, i32) {
    %c0_i32 = arith.constant 0 : i32
    %c0_i32_0 = arith.constant 0 : i32
    return %arg0, %c0_i32 : i32, i32
  }
}

</mosaic_0001>

<llo_original>
// kernel: tpu_custom_call.1
$region0: #{tpu_custom_call.1}
  #allocation0 [shape = 'u32[]', space=smem, size = 0x4, offset = 0x4, fixed_abs, tag = 'smem constant byte address 0x4 - core index']
  #allocation1 [shape = 'u32[144,128]{1,0:T(1,128)}', space=vmem, size = 0x12000, scoped, tag = 'internal scratch']
  %s0 = inlined_call_operand.hbm [shape: bf16[512,128], index: 0, kind: input, shape index: {}]
  %s1 = inlined_call_operand.hbm [shape: bf16[128,128], index: 1, kind: input, shape index: {}]
  %s2 = inlined_call_operand.vmem [shape: f32[1,128], index: 2, kind: input, shape index: {}]
  %s3 = inlined_call_operand.hbm [shape: f32[512,128], index: 3, kind: output, shape index: {}]
  %s4 = sld [smem:[#allocation0]]
  $region53: #{tpu_custom_call.1} parent=0
    _
  %s6 = ssub.s32 1, %s4
  %s7 = scalar_select 0, %s6, %s4
  $region1: #{tpu_custom_call.1} parent=0
    #allocation2 [shape = 'u8[131072]{0}', space=vmem, size = 0x20000, scoped, tag = 'input window, operand 0']
    #allocation3 [shape = 's32[2]{0}', space=sflag, size = 0x8, scoped, tag = 'scoped memory for tpu_custom_call.1']
    #allocation4 [shape = 's32[2]{0}', space=sflag, size = 0x8, scoped, tag = 'scoped memory for tpu_custom_call.1']
    #allocation5 [shape = 'u8[32768]{0}', space=vmem, size = 0x8000, scoped, tag = 'input window, operand 1, single buffered']
    #allocation6 [shape = 's32[1]{0}', space=sflag, size = 0x4, scoped, tag = 'scoped memory for tpu_custom_call.1']
    #allocation7 [shape = 'u8[262144]{0}', space=vmem, size = 0x40000, scoped, tag = 'output window, operand 0']
    %8 = vsyncpa [#allocation3], 0
    %s9 = scalar_lea.sflag [#allocation3], 1
    %10 = vsyncpa %s9, 0
    %11 = vsyncpa [#allocation6], 0
    %12 = vsyncpa [#allocation4], 0
    %s13 = scalar_lea.sflag [#allocation4], 1
    %14 = vsyncpa %s13, 0
    loop: start=0, step=1, limit=4
    $region2: #{tpu_custom_call.1} parent=1 // loop_pre_header
      _
    $region3: #{tpu_custom_call.1} parent=1 // loop_header
      %s16 = sphi 0, %s20
      %p17 = scmp.ge.s32.totalorder %s16, 4
      %s26 = sphi 0, %s28
      %s29 = sphi 0, %s26
      %s30 = sphi 0, %s29
      %s46 = sphi 0, %s30
      %s50 = sphi 0, %s50
      %s52 = sphi 0, %s50
      %s53 = sphi 0, %s52
      %s67 = sphi 0, %s53
      %s71 = sphi 0, %s71
      %s73 = sphi 0, %s71
      %s74 = sphi 0, %s73
      %s88 = sphi 0, %s74
      %s94 = sphi 0, %s96
      %s97 = sphi 0, %s94
      %s98 = sphi 0, %s97
      %s114 = sphi 0, %s98
    $region4: #{tpu_custom_call.1} parent=1 // loop_header_branch
      %19 = sbr.rel (%p17) target = $region8
    $region5: #{tpu_custom_call.1} parent=1 // loop_body
      %s21 = ssub.s32 %s16, 1
      %s22 = ssub.s32 %s16, 2
      %s23 = sadd.s32 %s16, 1
      %s24 = ssub.s32 %s16, %s23
      %p25 = scmp.eq.s32.totalorder %s24, 0
      %s27 = sadd.s32 %s26, 1
      %s28 = scalar_select %p25, %s26, %s27
      %p31 = pneg %p25
      %p32 = scmp.eq.s32.totalorder %s16, 1
      %p33 = por %p31, %p32
      %p34 = scmp.ne.s32.totalorder %s26, %s29
      %p35 = scmp.eq.s32.totalorder %s16, 0
      %p36 = por %p34, %p35
      %p37 = scmp.ne.s32.totalorder %s26, %s29
      %p38 = scmp.eq.s32.totalorder %s21, 1
      %p39 = por %p37, %p38
      %p40 = scmp.ne.s32.totalorder %s29, %s30
      %p41 = scmp.eq.s32.totalorder %s21, 0
      %p42 = por %p40, %p41
      %p43 = scmp.ne.s32.totalorder %s29, %s30
      %p44 = scmp.eq.s32.totalorder %s22, 1
      %p45 = por %p43, %p44
      %p47 = scmp.ne.s32.totalorder %s30, %s46
      %p48 = scmp.eq.s32.totalorder %s22, 0
      %p49 = por %p47, %p48
      %s51 = sadd.s32 %s50, 1
      %p54 = scmp.eq.s32.totalorder %s16, 1
      %p55 = scmp.ne.s32.totalorder %s50, %s52
      %p56 = scmp.eq.s32.totalorder %s16, 0
      %p57 = por %p55, %p56
      %p58 = scmp.ne.s32.totalorder %s50, %s52
      %p59 = scmp.eq.s32.totalorder %s21, 1
      %p60 = por %p58, %p59
      %p61 = scmp.ne.s32.totalorder %s52, %s53
      %p62 = scmp.eq.s32.totalorder %s21, 0
      %p63 = por %p61, %p62
      %p64 = scmp.ne.s32.totalorder %s52, %s53
      %p65 = scmp.eq.s32.totalorder %s22, 1
      %p66 = por %p64, %p65
      %p68 = scmp.ne.s32.totalorder %s53, %s67
      %p69 = scmp.eq.s32.totalorder %s22, 0
      %p70 = por %p68, %p69
      %s72 = sadd.s32 %s71, 1
      %p75 = scmp.eq.s32.totalorder %s16, 1
      %p76 = scmp.ne.s32.totalorder %s71, %s73
      %p77 = scmp.eq.s32.totalorder %s16, 0
      %p78 = por %p76, %p77
      %p79 = scmp.ne.s32.totalorder %s71, %s73
      %p80 = scmp.eq.s32.totalorder %s21, 1
      %p81 = por %p79, %p80
      %p82 = scmp.ne.s32.totalorder %s73, %s74
      %p83 = scmp.eq.s32.totalorder %s21, 0
      %p84 = por %p82, %p83
      %p85 = scmp.ne.s32.totalorder %s73, %s74
      %p86 = scmp.eq.s32.totalorder %s22, 1
      %p87 = por %p85, %p86
      %p89 = scmp.ne.s32.totalorder %s74, %s88
      %p90 = scmp.eq.s32.totalorder %s22, 0
      %p91 = por %p89, %p90
      %s92 = ssub.s32 %s16, %s23
      %p93 = scmp.eq.s32.totalorder %s92, 0
      %s95 = sadd.s32 %s94, 1
      %s96 = scalar_select %p93, %s94, %s95
      %p99 = pneg %p93
      %p100 = scmp.eq.s32.totalorder %s16, 1
      %p101 = por %p99, %p100
      %p102 = scmp.ne.s32.totalorder %s94, %s97
      %p103 = scmp.eq.s32.totalorder %s16, 0
      %p104 = por %p102, %p103
      %p105 = scmp.ne.s32.totalorder %s94, %s97
      %p106 = scmp.eq.s32.totalorder %s21, 1
      %p107 = por %p105, %p106
      %p108 = scmp.ne.s32.totalorder %s97, %s98
      %p109 = scmp.eq.s32.totalorder %s21, 0
      %p110 = por %p108, %p109
      %p111 = scmp.ne.s32.totalorder %s97, %s98
      %p112 = scmp.eq.s32.totalorder %s22, 1
      %p113 = por %p111, %p112
      %p115 = scmp.ne.s32.totalorder %s98, %s114
      %p116 = scmp.eq.s32.totalorder %s22, 0
      %p117 = por %p115, %p116
      %p118 = scmp.le.s32.totalorder 1, %s16
      %p119 = scmp.lt.s32.totalorder %s16, 3
      %p120 = pnand %p118, %p119
      %p121 = pneg %p120
      // Predicated region
      $region9: #{tpu_custom_call.1} parent=5 // pred_check
        _
      $region10: #{tpu_custom_call.1} parent=5 // pred_check_branch
        %123 = sbr.rel (%p120) target = $region12
      $region11: #{tpu_custom_call.1} parent=5 // pred_region
        %s124 = ssub.s32 %s16, 1
        // Predicated region
        $region13: #{tpu_custom_call.1} parent=11 // pred_check
          %p125 = pneg %p63
        $region14: #{tpu_custom_call.1} parent=11 // pred_check_branch
          %127 = sbr.rel (%p125) target = $region16
        $region15: #{tpu_custom_call.1} parent=11 // pred_region
          %s129 = ssub.s32 1024, 1024
          %130 = vsyncadd [#allocation6], %s129
          %s131 = sshll.u32 [#allocation5], 4
          %s132 = int_to_ptr.vmem [resolvable:$true] %s131
          %137 = dma.hbm_to_vmem [thread:$0]  %s1, 1024, %s132, [#allocation6], 64, 64, 4
        $region16: #{tpu_custom_call.1} parent=11 // pred_fallthru
          _
        // Predicated region
        $region17: #{tpu_custom_call.1} parent=11 // pred_check
          %p138 = pneg %p84
        $region18: #{tpu_custom_call.1} parent=11 // pred_check_branch
          %140 = sbr.rel (%p138) target = $region20
        $region19: #{tpu_custom_call.1} parent=11 // pred_region
          _
        $region20: #{tpu_custom_call.1} parent=11 // pred_fallthru
          _
      $region12: #{tpu_custom_call.1} parent=5 // pred_fallthru
        _
      %p141 = scmp.lt.s32.totalorder %s16, 2
      // Predicated region
      $region21: #{tpu_custom_call.1} parent=5 // pred_check
        %p142 = pneg %p141
      $region22: #{tpu_custom_call.1} parent=5 // pred_check_branch
        %144 = sbr.rel (%p142) target = $region24
      $region23: #{tpu_custom_call.1} parent=5 // pred_region
        // Predicated region
        $region25: #{tpu_custom_call.1} parent=23 // pred_check
          %p145 = pneg %p36
        $region26: #{tpu_custom_call.1} parent=23 // pred_check_branch
          %147 = sbr.rel (%p145) target = $region28
        $region27: #{tpu_custom_call.1} parent=23 // pred_region
          %s148 = sand.u32 %s26, 1
          %s149 = scalar_lea.sflag [#allocation3], %s148
          %s150 = sand.u32 %s26, 1
          %s151 = smul.addr %s150, 128
          %s152 = scalar_lea.vmem [#allocation2], %s151
          %s153 = smul.u32 32, %s16
          %s155 = ssub.s32 2048, 2048
          %156 = vsyncadd %s149, %s155
          %s157 = smul.addr %s153, 64
          %s158 = scalar_lea.hbm %s0, %s157
          %s159 = sshll.u32 %s152, 4
          %s160 = int_to_ptr.vmem [resolvable:$true] %s159
          %165 = dma.hbm_to_vmem [thread:$0]  %s158, 2048, %s160, %s149, 64, 64, 4
        $region28: #{tpu_custom_call.1} parent=23 // pred_fallthru
          _
      $region24: #{tpu_custom_call.1} parent=5 // pred_fallthru
        _
      %p166 = scmp.le.s32.totalorder 1, %s16
      %p167 = scmp.lt.s32.totalorder %s16, 3
      %p168 = pnand %p166, %p167
      %p169 = pneg %p168
      // Predicated region
      $region29: #{tpu_custom_call.1} parent=5 // pred_check
        _
      $region30: #{tpu_custom_call.1} parent=5 // pred_check_branch
        %171 = sbr.rel (%p168) target = $region32
      $region31: #{tpu_custom_call.1} parent=5 // pred_region
        %s172 = ssub.s32 %s16, 1
        %s173 = sand.u32 %s29, 1
        %s174 = scalar_lea.sflag [#allocation3], %s173
        %s175 = sand.u32 %s29, 1
        %s176 = smul.addr %s175, 128
        %s177 = scalar_lea.vmem [#allocation2], %s176
        // Predicated region
        $region33: #{tpu_custom_call.1} parent=31 // pred_check
          %p178 = pneg %p42
        $region34: #{tpu_custom_call.1} parent=31 // pred_check_branch
          %180 = sbr.rel (%p178) target = $region36
        $region35: #{tpu_custom_call.1} parent=31 // pred_region
          %181 = dma.done %s174, 2048
        $region36: #{tpu_custom_call.1} parent=31 // pred_fallthru
          _
        // Predicated region
        $region37: #{tpu_custom_call.1} parent=31 // pred_check
          %p182 = pneg %p63
        $region38: #{tpu_custom_call.1} parent=31 // pred_check_branch
          %184 = sbr.rel (%p182) target = $region40
        $region39: #{tpu_custom_call.1} parent=31 // pred_region
          %185 = dma.done [#allocation6], 1024
        $region40: #{tpu_custom_call.1} parent=31 // pred_fallthru
          _
        %s186 = sand.u32 %s29, 1
        %s187 = scalar_lea.sflag [#allocation3], %s186
        %s188 = sand.u32 %s29, 1
        %s189 = smul.addr %s188, 128
        %s190 = scalar_lea.vmem [#allocation2], %s189
        %p191 = pneg %p42
        %p192 = pneg %p39
        %p193 = pneg %p63
        %p194 = pneg %p60
        %p195 = pneg %p84
        %p196 = pneg %p81
        %p197 = pneg %p110
        %p198 = pneg %p107
        %s199 = sand.u32 %s97, 1
        %s200 = scalar_lea.sflag [#allocation4], %s199
        %s201 = sand.u32 %s97, 1
        %s202 = smul.addr %s201, 256
        %s203 = scalar_lea.vmem [#allocation7], %s202
        %s204 = smul.u32 32, %s21
        %s205 = smul.u32 32, %s21
        %v207 = vld [vmem:[%s177] sm:$0xf]
        %v208 = vld [vmem:[%s177 + $0x4] sm:$0xf]
        %v209 = vld [vmem:[%s177 + $0x8] sm:$0xf]
        %v210 = vld [vmem:[%s177 + $0xc] sm:$0xf]
        %v211 = vld [vmem:[%s177 + $0x10] sm:$0xf]
        %v212 = vld [vmem:[%s177 + $0x14] sm:$0xf]
        %v213 = vld [vmem:[%s177 + $0x18] sm:$0xf]
        %v214 = vld [vmem:[%s177 + $0x1c] sm:$0xf]
        %v215 = vld [vmem:[%s177 + $0x20] sm:$0xf]
        %v216 = vld [vmem:[%s177 + $0x24] sm:$0xf]
        %v217 = vld [vmem:[%s177 + $0x28] sm:$0xf]
        %v218 = vld [vmem:[%s177 + $0x2c] sm:$0xf]
        %v219 = vld [vmem:[%s177 + $0x30] sm:$0xf]
        %v220 = vld [vmem:[%s177 + $0x34] sm:$0xf]
        %v221 = vld [vmem:[%s177 + $0x38] sm:$0xf]
        %v222 = vld [vmem:[%s177 + $0x3c] sm:$0xf]
        %v223 = vld [vmem:[%s177 + $0x40] sm:$0xf]
        %v224 = vld [vmem:[%s177 + $0x44] sm:$0xf]
        %v225 = vld [vmem:[%s177 + $0x48] sm:$0xf]
        %v226 = vld [vmem:[%s177 + $0x4c] sm:$0xf]
        %v227 = vld [vmem:[%s177 + $0x50] sm:$0xf]
        %v228 = vld [vmem:[%s177 + $0x54] sm:$0xf]
        %v229 = vld [vmem:[%s177 + $0x58] sm:$0xf]
        %v230 = vld [vmem:[%s177 + $0x5c] sm:$0xf]
        %v231 = vld [vmem:[%s177 + $0x60] sm:$0xf]
        %v232 = vld [vmem:[%s177 + $0x64] sm:$0xf]
        %v233 = vld [vmem:[%s177 + $0x68] sm:$0xf]
        %v234 = vld [vmem:[%s177 + $0x6c] sm:$0xf]
        %v235 = vld [vmem:[%s177 + $0x70] sm:$0xf]
        %v236 = vld [vmem:[%s177 + $0x74] sm:$0xf]
        %v237 = vld [vmem:[%s177 + $0x78] sm:$0xf]
        %v238 = vld [vmem:[%s177 + $0x7c] sm:$0xf]
        %v239 = vld [vmem:[#allocation5] sm:$0xf]
        %v240 = vld [vmem:[#allocation5 + $0x4] sm:$0xf]
        %v241 = vld [vmem:[#allocation5 + $0x8] sm:$0xf]
        %v242 = vld [vmem:[#allocation5 + $0xc] sm:$0xf]
        %v243 = vld [vmem:[#allocation5 + $0x10] sm:$0xf]
        %v244 = vld [vmem:[#allocation5 + $0x14] sm:$0xf]
        %v245 = vld [vmem:[#allocation5 + $0x18] sm:$0xf]
        %v246 = vld [vmem:[#allocation5 + $0x1c] sm:$0xf]
        %v247 = vld [vmem:[#allocation5 + $0x20] sm:$0xf]
        %v248 = vld [vmem:[#allocation5 + $0x24] sm:$0xf]
        %v249 = vld [vmem:[#allocation5 + $0x28] sm:$0xf]
        %v250 = vld [vmem:[#allocation5 + $0x2c] sm:$0xf]
        %v251 = vld [vmem:[#allocation5 + $0x30] sm:$0xf]
        %v252 = vld [vmem:[#allocation5 + $0x34] sm:$0xf]
        %v253 = vld [vmem:[#allocation5 + $0x38] sm:$0xf]
        %v254 = vld [vmem:[#allocation5 + $0x3c] sm:$0xf]
        %v255 = vld [vmem:[%s2] sm:$0x1]
        %v257 = vlaneseq
        %v258 = vshrl.u32 %v257, 7
        %v259 = vsub.s32 0, %v258
        %v260 = vrot.slane %v255, %v259
        %v294 = vunpack.c.l.b16 %v207
        %v295 = vunpack.c.l.b16 %v208
        %v296 = vunpack.c.l.b16 %v209
        %v297 = vunpack.c.l.b16 %v210
        %v298 = vunpack.c.l.b16 %v211
        %v299 = vunpack.c.l.b16 %v212
        %v300 = vunpack.c.l.b16 %v213
        %v301 = vunpack.c.l.b16 %v214
        %v302 = vunpack.c.l.b16 %v215
        %v303 = vunpack.c.l.b16 %v216
        %v304 = vunpack.c.l.b16 %v217
        %v305 = vunpack.c.l.b16 %v218
        %v306 = vunpack.c.l.b16 %v219
        %v307 = vunpack.c.l.b16 %v220
        %v308 = vunpack.c.l.b16 %v221
        %v309 = vunpack.c.l.b16 %v222
        %v310 = vunpack.c.l.b16 %v223
        %v311 = vunpack.c.l.b16 %v224
        %v312 = vunpack.c.l.b16 %v225
        %v313 = vunpack.c.l.b16 %v226
        %v314 = vunpack.c.l.b16 %v227
        %v315 = vunpack.c.l.b16 %v228
        %v316 = vunpack.c.l.b16 %v229
        %v317 = vunpack.c.l.b16 %v230
        %v318 = vunpack.c.l.b16 %v231
        %v319 = vunpack.c.l.b16 %v232
        %v320 = vunpack.c.l.b16 %v233
        %v321 = vunpack.c.l.b16 %v234
        %v322 = vunpack.c.l.b16 %v235
        %v323 = vunpack.c.l.b16 %v236
        %v324 = vunpack.c.l.b16 %v237
        %v325 = vunpack.c.l.b16 %v238
        %v326 = vpack.c.b16 %v295, %v294
        %v327 = vpack.c.b16 %v297, %v296
        %v328 = vpack.c.b16 %v299, %v298
        %v329 = vpack.c.b16 %v301, %v300
        %v330 = vpack.c.b16 %v303, %v302
        %v331 = vpack.c.b16 %v305, %v304
        %v332 = vpack.c.b16 %v307, %v306
        %v333 = vpack.c.b16 %v309, %v308
        %v334 = vpack.c.b16 %v311, %v310
        %v335 = vpack.c.b16 %v313, %v312
        %v336 = vpack.c.b16 %v315, %v314
        %v337 = vpack.c.b16 %v317, %v316
        %v338 = vpack.c.b16 %v319, %v318
        %v339 = vpack.c.b16 %v321, %v320
        %v340 = vpack.c.b16 %v323, %v322
        %v341 = vpack.c.b16 %v325, %v324
        %v374 = vunpack.c.l.b16 %v239
        %v375 = vunpack.c.l.b16 %v240
        %v376 = vunpack.c.l.b16 %v241
        %v377 = vunpack.c.l.b16 %v242
        %v378 = vunpack.c.l.b16 %v243
        %v379 = vunpack.c.l.b16 %v244
        %v380 = vunpack.c.l.b16 %v245
        %v381 = vunpack.c.l.b16 %v246
        %v382 = vunpack.c.l.b16 %v247
        %v383 = vunpack.c.l.b16 %v248
        %v384 = vunpack.c.l.b16 %v249
        %v385 = vunpack.c.l.b16 %v250
        %v386 = vunpack.c.l.b16 %v251
        %v387 = vunpack.c.l.b16 %v252
        %v388 = vunpack.c.l.b16 %v253
        %v389 = vunpack.c.l.b16 %v254
        %v390 = vpack.c.b16 %v375, %v374
        %v391 = vpack.c.b16 %v377, %v376
        %v392 = vpack.c.b16 %v379, %v378
        %v393 = vpack.c.b16 %v381, %v380
        %v394 = vpack.c.b16 %v383, %v382
        %v395 = vpack.c.b16 %v385, %v384
        %v396 = vpack.c.b16 %v387, %v386
        %v397 = vpack.c.b16 %v389, %v388
        %406 = vmatprep.subr.bf16.mxu0 0
        %407 = vmatpush1.bf16.msra.mxu0 %v390
        %408 = vmatprep.subr.bf16.mxu0 0
        %409 = vmatpush1.bf16.msra.mxu0 %v391
        %410 = vmatprep.subr.bf16.mxu0 0
        %411 = vmatpush1.bf16.msra.mxu0 %v392
        %412 = vmatprep.subr.bf16.mxu0 0
        %413 = vmatpush1.bf16.msra.mxu0 %v393
        %414 = vmatprep.subr.bf16.mxu0 0
        %415 = vmatpush1.bf16.msra.mxu0 %v394
        %416 = vmatprep.subr.bf16.mxu0 0
        %417 = vmatpush1.bf16.msra.mxu0 %v395
        %418 = vmatprep.subr.bf16.mxu0 0
        %419 = vmatpush1.bf16.msra.mxu0 %v396
        %420 = vmatprep.subr.bf16.mxu0 0
        %421 = vmatpush1.bf16.msra.mxu0 %v397
        %422 = vmatprep.subr.bf16.mxu0 0
        %423 = vmatpush1.bf16.msra.mxu0 0
        %424 = vmatprep.subr.bf16.mxu0 0
        %425 = vmatpush1.bf16.msra.mxu0 0
        %426 = vmatprep.subr.bf16.mxu0 0
        %427 = vmatpush1.bf16.msra.mxu0 0
        %428 = vmatprep.subr.bf16.mxu0 0
        %429 = vmatpush1.bf16.msra.mxu0 0
        %430 = vmatprep.subr.bf16.mxu0 0
        %431 = vmatpush1.bf16.msra.mxu0 0
        %432 = vmatprep.subr.bf16.mxu0 0
        %433 = vmatpush1.bf16.msra.mxu0 0
        %434 = vmatprep.subr.bf16.mxu0 0
        %435 = vmatpush1.bf16.msra.mxu0 0
        %436 = vmatprep.subr.bf16.mxu0 0
        %437 = vmatpush1.bf16.msra.mxu0 0
        %438 = vmatprep.mubr.bf16.mxu0 0
        %439 = vmatmul.mubr.bf16.gmra.mrb[0].mxu0 %v326
        %v440 = vpop.f32.mrb[0].mxu0
        %v441 = vadd.f32 %v260, %v440
        %v442 = vpop.f32.mrb[0].mxu0
        %v443 = vpop.f32.mrb[0].mxu0
        %v444 = vadd.f32 %v260, %v443
        %v445 = vpop.f32.mrb[0].mxu0
        %446 = vmatprep.mubr.bf16.mxu0 0
        %447 = vmatmul.mubr.bf16.gmra.mrb[0].mxu0 %v327
        %v448 = vpop.f32.mrb[0].mxu0
        %v449 = vadd.f32 %v260, %v448
        %v450 = vpop.f32.mrb[0].mxu0
        %v451 = vpop.f32.mrb[0].mxu0
        %v452 = vadd.f32 %v260, %v451
        %v453 = vpop.f32.mrb[0].mxu0
        %454 = vmatprep.mubr.bf16.mxu0 0
        %455 = vmatmul.mubr.bf16.gmra.mrb[0].mxu0 %v328
        %v456 = vpop.f32.mrb[0].mxu0
        %v457 = vadd.f32 %v260, %v456
        %v458 = vpop.f32.mrb[0].mxu0
        %v459 = vpop.f32.mrb[0].mxu0
        %v460 = vadd.f32 %v260, %v459
        %v461 = vpop.f32.mrb[0].mxu0
        %462 = vmatprep.mubr.bf16.mxu0 0
        %463 = vmatmul.mubr.bf16.gmra.mrb[0].mxu0 %v329
        %v464 = vpop.f32.mrb[0].mxu0
        %v465 = vadd.f32 %v260, %v464
        %v466 = vpop.f32.mrb[0].mxu0
        %v467 = vpop.f32.mrb[0].mxu0
        %v468 = vadd.f32 %v260, %v467
        %v469 = vpop.f32.mrb[0].mxu0
        %470 = vmatprep.mubr.bf16.mxu0 0
        %471 = vmatmul.mubr.bf16.gmra.mrb[0].mxu0 %v330
        %v472 = vpop.f32.mrb[0].mxu0
        %v473 = vadd.f32 %v260, %v472
        %v474 = vpop.f32.mrb[0].mxu0
        %v475 = vpop.f32.mrb[0].mxu0
        %v476 = vadd.f32 %v260, %v475
        %v477 = vpop.f32.mrb[0].mxu0
        %478 = vmatprep.mubr.bf16.mxu0 0
        %479 = vmatmul.mubr.bf16.gmra.mrb[0].mxu0 %v331
        %v480 = vpop.f32.mrb[0].mxu0
        %v481 = vadd.f32 %v260, %v480
        %v482 = vpop.f32.mrb[0].mxu0
        %v483 = vpop.f32.mrb[0].mxu0
        %v484 = vadd.f32 %v260, %v483
        %v485 = vpop.f32.mrb[0].mxu0
        %486 = vmatprep.mubr.bf16.mxu0 0
        %487 = vmatmul.mubr.bf16.gmra.mrb[0].mxu0 %v332
        %v488 = vpop.f32.mrb[0].mxu0
        %v489 = vadd.f32 %v260, %v488
        %v490 = vpop.f32.mrb[0].mxu0
        %v491 = vpop.f32.mrb[0].mxu0
        %v492 = vadd.f32 %v260, %v491
        %v493 = vpop.f32.mrb[0].mxu0
        %494 = vmatprep.mubr.bf16.mxu0 0
        %495 = vmatmul.mubr.bf16.gmra.mrb[0].mxu0 %v333
        %v496 = vpop.f32.mrb[0].mxu0
        %v497 = vadd.f32 %v260, %v496
        %v498 = vpop.f32.mrb[0].mxu0
        %v499 = vpop.f32.mrb[0].mxu0
        %v500 = vadd.f32 %v260, %v499
        %v501 = vpop.f32.mrb[0].mxu0
        %502 = vmatprep.mubr.bf16.mxu0 0
        %503 = vmatmul.mubr.bf16.gmra.mrb[0].mxu0 %v334
        %v504 = vpop.f32.mrb[0].mxu0
        %v505 = vadd.f32 %v260, %v504
        %v506 = vpop.f32.mrb[0].mxu0
        %v507 = vpop.f32.mrb[0].mxu0
        %v508 = vadd.f32 %v260, %v507
        %v509 = vpop.f32.mrb[0].mxu0
        %510 = vmatprep.mubr.bf16.mxu0 0
        %511 = vmatmul.mubr.bf16.gmra.mrb[0].mxu0 %v335
        %v512 = vpop.f32.mrb[0].mxu0
        %v513 = vadd.f32 %v260, %v512
        %v514 = vpop.f32.mrb[0].mxu0
        %v515 = vpop.f32.mrb[0].mxu0
        %v516 = vadd.f32 %v260, %v515
        %v517 = vpop.f32.mrb[0].mxu0
        %518 = vmatprep.mubr.bf16.mxu0 0
        %519 = vmatmul.mubr.bf16.gmra.mrb[0].mxu0 %v336
        %v520 = vpop.f32.mrb[0].mxu0
        %v521 = vadd.f32 %v260, %v520
        %v522 = vpop.f32.mrb[0].mxu0
        %v523 = vpop.f32.mrb[0].mxu0
        %v524 = vadd.f32 %v260, %v523
        %v525 = vpop.f32.mrb[0].mxu0
        %526 = vmatprep.mubr.bf16.mxu0 0
        %527 = vmatmul.mubr.bf16.gmra.mrb[0].mxu0 %v337
        %v528 = vpop.f32.mrb[0].mxu0
        %v529 = vadd.f32 %v260, %v528
        %v530 = vpop.f32.mrb[0].mxu0
        %v531 = vpop.f32.mrb[0].mxu0
        %v532 = vadd.f32 %v260, %v531
        %v533 = vpop.f32.mrb[0].mxu0
        %534 = vmatprep.mubr.bf16.mxu0 0
        %535 = vmatmul.mubr.bf16.gmra.mrb[0].mxu0 %v338
        %v536 = vpop.f32.mrb[0].mxu0
        %v537 = vadd.f32 %v260, %v536
        %v538 = vpop.f32.mrb[0].mxu0
        %v539 = vpop.f32.mrb[0].mxu0
        %v540 = vadd.f32 %v260, %v539
        %v541 = vpop.f32.mrb[0].mxu0
        %542 = vmatprep.mubr.bf16.mxu0 0
        %543 = vmatmul.mubr.bf16.gmra.mrb[0].mxu0 %v339
        %v544 = vpop.f32.mrb[0].mxu0
        %v545 = vadd.f32 %v260, %v544
        %v546 = vpop.f32.mrb[0].mxu0
        %v547 = vpop.f32.mrb[0].mxu0
        %v548 = vadd.f32 %v260, %v547
        %v549 = vpop.f32.mrb[0].mxu0
        %550 = vmatprep.mubr.bf16.mxu0 0
        %551 = vmatmul.mubr.bf16.gmra.mrb[0].mxu0 %v340
        %v552 = vpop.f32.mrb[0].mxu0
        %v553 = vadd.f32 %v260, %v552
        %v554 = vpop.f32.mrb[0].mxu0
        %v555 = vpop.f32.mrb[0].mxu0
        %v556 = vadd.f32 %v260, %v555
        %v557 = vpop.f32.mrb[0].mxu0
        %558 = vmatprep.mubr.bf16.mxu0 0
        %559 = vmatmul.mubr.bf16.gmra.mrb[0].mxu0 %v341
        %v560 = vpop.f32.mrb[0].mxu0
        %v561 = vadd.f32 %v260, %v560
        %v562 = vpop.f32.mrb[0].mxu0
        %v563 = vpop.f32.mrb[0].mxu0
        %v564 = vadd.f32 %v260, %v563
        %v565 = vpop.f32.mrb[0].mxu0
        %566 = vdwg.mxu0
        %v567 = vmax.f32 %v441, 0.0
        %v568 = vmax.f32 %v444, 0.0
        %v569 = vmax.f32 %v449, 0.0
        %v570 = vmax.f32 %v452, 0.0
        %v571 = vmax.f32 %v457, 0.0
        %v572 = vmax.f32 %v460, 0.0
        %v573 = vmax.f32 %v465, 0.0
        %v574 = vmax.f32 %v468, 0.0
        %v575 = vmax.f32 %v473, 0.0
        %v576 = vmax.f32 %v476, 0.0
        %v577 = vmax.f32 %v481, 0.0
        %v578 = vmax.f32 %v484, 0.0
        %v579 = vmax.f32 %v489, 0.0
        %v580 = vmax.f32 %v492, 0.0
        %v581 = vmax.f32 %v497, 0.0
        %v582 = vmax.f32 %v500, 0.0
        %v583 = vmax.f32 %v505, 0.0
        %v584 = vmax.f32 %v508, 0.0
        %v585 = vmax.f32 %v513, 0.0
        %v586 = vmax.f32 %v516, 0.0
        %v587 = vmax.f32 %v521, 0.0
        %v588 = vmax.f32 %v524, 0.0
        %v589 = vmax.f32 %v529, 0.0
        %v590 = vmax.f32 %v532, 0.0
        %v591 = vmax.f32 %v537, 0.0
        %v592 = vmax.f32 %v540, 0.0
        %v593 = vmax.f32 %v545, 0.0
        %v594 = vmax.f32 %v548, 0.0
        %v595 = vmax.f32 %v553, 0.0
        %v596 = vmax.f32 %v556, 0.0
        %v597 = vmax.f32 %v561, 0.0
        %v598 = vmax.f32 %v564, 0.0
        %599 = vst [vmem:[%s203] sm:$0xff] %v567
        %600 = vst [vmem:[%s203 + $0x8] sm:$0xff] %v568
        %601 = vst [vmem:[%s203 + $0x10] sm:$0xff] %v569
        %602 = vst [vmem:[%s203 + $0x18] sm:$0xff] %v570
        %603 = vst [vmem:[%s203 + $0x20] sm:$0xff] %v571
        %604 = vst [vmem:[%s203 + $0x28] sm:$0xff] %v572
        %605 = vst [vmem:[%s203 + $0x30] sm:$0xff] %v573
        %606 = vst [vmem:[%s203 + $0x38] sm:$0xff] %v574
        %607 = vst [vmem:[%s203 + $0x40] sm:$0xff] %v575
        %608 = vst [vmem:[%s203 + $0x48] sm:$0xff] %v576
        %609 = vst [vmem:[%s203 + $0x50] sm:$0xff] %v577
        %610 = vst [vmem:[%s203 + $0x58] sm:$0xff] %v578
        %611 = vst [vmem:[%s203 + $0x60] sm:$0xff] %v579
        %612 = vst [vmem:[%s203 + $0x68] sm:$0xff] %v580
        %613 = vst [vmem:[%s203 + $0x70] sm:$0xff] %v581
        %614 = vst [vmem:[%s203 + $0x78] sm:$0xff] %v582
        %615 = vst [vmem:[%s203 + $0x80] sm:$0xff] %v583
        %616 = vst [vmem:[%s203 + $0x88] sm:$0xff] %v584
        %617 = vst [vmem:[%s203 + $0x90] sm:$0xff] %v585
        %618 = vst [vmem:[%s203 + $0x98] sm:$0xff] %v586
        %619 = vst [vmem:[%s203 + $0xa0] sm:$0xff] %v587
        %620 = vst [vmem:[%s203 + $0xa8] sm:$0xff] %v588
        %621 = vst [vmem:[%s203 + $0xb0] sm:$0xff] %v589
        %622 = vst [vmem:[%s203 + $0xb8] sm:$0xff] %v590
        %623 = vst [vmem:[%s203 + $0xc0] sm:$0xff] %v591
        %624 = vst [vmem:[%s203 + $0xc8] sm:$0xff] %v592
        %625 = vst [vmem:[%s203 + $0xd0] sm:$0xff] %v593
        %626 = vst [vmem:[%s203 + $0xd8] sm:$0xff] %v594
        %627 = vst [vmem:[%s203 + $0xe0] sm:$0xff] %v595
        %628 = vst [vmem:[%s203 + $0xe8] sm:$0xff] %v596
        %629 = vst [vmem:[%s203 + $0xf0] sm:$0xff] %v597
        %630 = vst [vmem:[%s203 + $0xf8] sm:$0xff] %v598
        %s631 = sand.u32 %s97, 1
        %s632 = scalar_lea.sflag [#allocation4], %s631
        %s633 = sand.u32 %s97, 1
        %s634 = smul.addr %s633, 256
        %s635 = scalar_lea.vmem [#allocation7], %s634
        // Predicated region
        $region41: #{tpu_custom_call.1} parent=31 // pred_check
          %p636 = pneg %p107
        $region42: #{tpu_custom_call.1} parent=31 // pred_check_branch
          %638 = sbr.rel (%p636) target = $region44
        $region43: #{tpu_custom_call.1} parent=31 // pred_region
          %s639 = smul.u32 32, %s21
          %s641 = ssub.s32 4096, 4096
          %642 = vsyncadd %s632, %s641
          %s643 = smul.addr %s639, 128
          %s644 = scalar_lea.hbm %s3, %s643
          %s645 = sshll.u32 %s635, 4
          %s646 = int_to_ptr.vmem [resolvable:$true] %s645
          %651 = dma.vmem_to_hbm [thread:$0]  %s646, 4096, %s644, %s632, 128, 128, 8
        $region44: #{tpu_custom_call.1} parent=31 // pred_fallthru
          _
      $region32: #{tpu_custom_call.1} parent=5 // pred_fallthru
        _
      %p652 = scmp.le.s32.totalorder 2, %s16
      // Predicated region
      $region45: #{tpu_custom_call.1} parent=5 // pred_check
        %p653 = pneg %p652
      $region46: #{tpu_custom_call.1} parent=5 // pred_check_branch
        %655 = sbr.rel (%p653) target = $region48
      $region47: #{tpu_custom_call.1} parent=5 // pred_region
        %s656 = ssub.s32 %s16, 2
        // Predicated region
        $region49: #{tpu_custom_call.1} parent=47 // pred_check
          %p657 = pneg %p113
        $region50: #{tpu_custom_call.1} parent=47 // pred_check_branch
          %659 = sbr.rel (%p657) target = $region52
        $region51: #{tpu_custom_call.1} parent=47 // pred_region
          %s660 = sand.u32 %s98, 1
          %s661 = scalar_lea.sflag [#allocation4], %s660
          %s662 = sand.u32 %s98, 1
          %s663 = smul.addr %s662, 256
          %s664 = scalar_lea.vmem [#allocation7], %s663
          %665 = dma.done %s661, 4096
        $region52: #{tpu_custom_call.1} parent=47 // pred_fallthru
          _
      $region48: #{tpu_custom_call.1} parent=5 // pred_fallthru
        _
    $region6: #{tpu_custom_call.1} parent=1 // loop_footer
      %s20 = sadd.s32 1, %s16
    $region7: #{tpu_custom_call.1} parent=1 // loop_footer_branch
      %15 = sbr.rel target = $region3
    $region8: #{tpu_custom_call.1} parent=1 // loop_exit
      _
    %666 = vsyncpa [#allocation3], 1
    %s667 = scalar_lea.sflag [#allocation3], 1
    %668 = vsyncpa %s667, 1
    %669 = vsyncpa [#allocation6], 1
    %670 = vsyncpa [#allocation4], 1
    %s671 = scalar_lea.sflag [#allocation4], 1
    %672 = vsyncpa %s671, 1

</llo_original>
